<compile_context>
chip_gen: v7x
topology: tpu7x:2x2x1
jax: 0.10.0
libtpu: 0.0.40
codegen_flags: <defaults>
</compile_context>

<pallas_src>
import jax
import jax.numpy as jnp
from jax.experimental import pallas as pl
from jax.experimental.pallas import tpu as pltpu

NUM_INPUTS = 250
NUM_L2 = 50
NUM_L3 = 50
NUM_OUTPUTS = 1

H_PAD = 128        # hidden dims 50 -> 128 (full vreg lane width); zero pad is inert
TILE_CAP = 4096    # rows per batch tile: 4096*250*4B = 4.0 MiB f32 per buffer


def _round_up(n, m):
    return (n + m - 1) // m * m


def _cdiv(a, b):
    return (a + b - 1) // b


def mlp_kernel(x_ref, w1_ref, b1_ref, w2_ref, b2_ref, w3_ref, b3_ref, o_ref):
    # x tile: (TILE_B, 250) f32, streamed.  Weights resident in VMEM (bf16/f32).
    x = x_ref[...].astype(jnp.bfloat16)
    a2 = jnp.tanh(
        jnp.dot(x, w1_ref[...], preferred_element_type=jnp.float32) + b1_ref[...]
    )
    a3 = jnp.tanh(
        jnp.dot(a2.astype(jnp.bfloat16), w2_ref[...],
                preferred_element_type=jnp.float32) + b2_ref[...]
    )
    # Layer 3 has N=1: VPU multiply + lane reduction (+ bias, sigmoid) instead of
    # a nearly-empty MXU matmul.  Padded lanes of w3/a3 are zero.
    z = jnp.sum(a3 * w3_ref[...], axis=-1, keepdims=True) + b3_ref[...]  # (TILE_B, 1)
    o_ref[...] = jax.nn.sigmoid(z)


@jax.jit
def mlp_forward(x, w1, b1, w2, b2, w3, b3):
    """Equivalent to the PyTorch MLP forward: x (B, 250) -> (B, 1)."""
    batch = x.shape[0]
    f32 = jnp.float32
    bf16 = jnp.bfloat16

    # Tile size: at least 2 grid steps for mid/large batches (v7x has 2 TCs),
    # capped at TILE_CAP rows so double-buffered tiles fit every generation's
    # scoped VMEM budget comfortably.
    tile_b = min(TILE_CAP, max(128, _round_up(_cdiv(batch, 2), 128)))
    grid = (_cdiv(batch, tile_b),)

    # Weights are tiny -> pad hidden dims to 128 lanes and cast matmul weights
    # to bf16 once here (they stay VMEM-resident across all grid steps).
    w1p = jnp.pad(w1.astype(f32), ((0, 0), (0, H_PAD - NUM_L2))).astype(bf16)
    b1p = jnp.pad(b1.astype(f32), ((0, 0), (0, H_PAD - NUM_L2)))
    w2p = jnp.pad(w2.astype(f32),
                  ((0, H_PAD - NUM_L2), (0, H_PAD - NUM_L3))).astype(bf16)
    b2p = jnp.pad(b2.astype(f32), ((0, 0), (0, H_PAD - NUM_L3)))
    w3p = jnp.pad(w3.astype(f32).T, ((0, 0), (0, H_PAD - NUM_L3)))   # (1, H_PAD)
    b3p = b3.astype(f32).reshape(1, 1)

    def const_spec(shape):
        # Full-array block, same block index every step -> stays VMEM-resident.
        return pl.BlockSpec(shape, lambda i: (0, 0))

    out = pl.pallas_call(
        mlp_kernel,
        out_shape=jax.ShapeDtypeStruct((batch, NUM_OUTPUTS), f32),
        grid=grid,
        in_specs=[
            # x streamed unpadded: full-extent last dim (250) is a legal block.
            pl.BlockSpec((tile_b, NUM_INPUTS), lambda i: (i, 0)),
            const_spec((NUM_INPUTS, H_PAD)),   # w1 (bf16)
            const_spec((1, H_PAD)),            # b1
            const_spec((H_PAD, H_PAD)),        # w2 (bf16)
            const_spec((1, H_PAD)),            # b2
            const_spec((1, H_PAD)),            # w3 row vector (f32)
            const_spec((1, 1)),                # b3
        ],
        out_specs=pl.BlockSpec((tile_b, NUM_OUTPUTS), lambda i: (i, 0)),
        compiler_params=pltpu.CompilerParams(
            dimension_semantics=("parallel",),       # independent batch tiles
            vmem_limit_bytes=32 * 1024 * 1024,       # explicit headroom, all gens
        ),
    )(x, w1p, b1p, w2p, b2p, w3p, b3p)

    return out


def init_params(key):
    """Deterministic init mimicking nn.Linear default (uniform +-1/sqrt(fan_in))."""

    def linear(k, fan_in, fan_out):
        kw, kb = jax.random.split(k)
        bound = 1.0 / jnp.sqrt(fan_in)
        # weight stored as (in, out) so the forward pass is x @ W + b
        w = jax.random.uniform(kw, (fan_in, fan_out), jnp.float32, -bound, bound)
        b = jax.random.uniform(kb, (1, fan_out), jnp.float32, -bound, bound)
        return w, b

    k1, k2, k3 = jax.random.split(key, 3)
    w1, b1 = linear(k1, NUM_INPUTS, NUM_L2)
    w2, b2 = linear(k2, NUM_L2, NUM_L3)
    w3, b3 = linear(k3, NUM_L3, NUM_OUTPUTS)
    return w1, b1, w2, b2, w3, b3


if __name__ == "__main__":
    key = jax.random.PRNGKey(0)
    kx, kp = jax.random.split(key)

    batch = 8
    x = jax.random.normal(kx, (batch, NUM_INPUTS), dtype=jnp.float32)
    params = init_params(kp)

    y_hat = mlp_forward(x, *params)
    jax.block_until_ready(y_hat)
    assert y_hat.shape == (batch, NUM_OUTPUTS)

    w1, b1, w2, b2, w3, b3 = params

    # Mixed-precision reference mirroring the kernel's bf16 matmul inputs.
    a2m = jnp.tanh(jnp.dot(x.astype(jnp.bfloat16), w1.astype(jnp.bfloat16),
                           preferred_element_type=jnp.float32) + b1)
    a3m = jnp.tanh(jnp.dot(a2m.astype(jnp.bfloat16), w2.astype(jnp.bfloat16),
                           preferred_element_type=jnp.float32) + b2)
    ref_mixed = jax.nn.sigmoid(a3m @ w3 + b3)
    assert jnp.allclose(y_hat, ref_mixed, atol=1e-4, rtol=0), float(
        jnp.max(jnp.abs(y_hat - ref_mixed)))

    # Full f32 reference (PyTorch module semantics); looser tolerance because the
    # kernel uses bf16 matmul inputs (f32 accumulation).
    a2 = jnp.tanh(x @ w1 + b1)
    a3 = jnp.tanh(a2 @ w2 + b2)
    ref_f32 = jax.nn.sigmoid(a3 @ w3 + b3)
    assert jnp.allclose(y_hat, ref_f32, atol=2e-2, rtol=0), float(
        jnp.max(jnp.abs(y_hat - ref_f32)))

    print("KERNEL_OK")
</pallas_src>

<mosaic_0001>
module attributes {stable_mosaic.version = 11 : i64} {
  func.func @mlp_kernel(%arg0: i32, %arg1: memref<128x250xf32, #tpu.memory_space<vmem>>, %arg2: memref<250x128xbf16, #tpu.memory_space<vmem>>, %arg3: memref<1x128xf32, #tpu.memory_space<vmem>>, %arg4: memref<128x128xbf16, #tpu.memory_space<vmem>>, %arg5: memref<1x128xf32, #tpu.memory_space<vmem>>, %arg6: memref<1x128xf32, #tpu.memory_space<vmem>>, %arg7: memref<1x1xf32, #tpu.memory_space<vmem>>, %arg8: memref<128x1xf32, #tpu.memory_space<vmem>>) attributes {dimension_semantics = [#tpu.dimension_semantics<parallel>], iteration_bounds = array<i64: 1>, scalar_prefetch = 0 : i64, scratch_operands = 0 : i64, tpu.core_type = #tpu.core_type<tc>, window_params = [{transform_indices = @transform_0, window_bounds = array<i64: 128, 250>}, {pipeline_mode = #tpu.pipeline_mode<synchronous>, transform_indices = @transform_1, window_bounds = array<i64: 250, 128>}, {pipeline_mode = #tpu.pipeline_mode<synchronous>, transform_indices = @transform_2, window_bounds = array<i64: 1, 128>}, {pipeline_mode = #tpu.pipeline_mode<synchronous>, transform_indices = @transform_3, window_bounds = array<i64: 128, 128>}, {pipeline_mode = #tpu.pipeline_mode<synchronous>, transform_indices = @transform_4, window_bounds = array<i64: 1, 128>}, {pipeline_mode = #tpu.pipeline_mode<synchronous>, transform_indices = @transform_5, window_bounds = array<i64: 1, 128>}, {pipeline_mode = #tpu.pipeline_mode<synchronous>, transform_indices = @transform_6, window_bounds = array<i64: 1, 1>}, {transform_indices = @transform_7, window_bounds = array<i64: 128, 1>}]} {
    %c0 = arith.constant 0 : index
    %c0_0 = arith.constant 0 : index
    %0 = vector.load %arg1[%c0, %c0_0] : memref<128x250xf32, #tpu.memory_space<vmem>>, vector<128x250xf32>
    %1 = arith.truncf %0 : vector<128x250xf32> to vector<128x250xbf16>
    %c0_1 = arith.constant 0 : index
    %c0_2 = arith.constant 0 : index
    %2 = vector.load %arg2[%c0_1, %c0_2] : memref<250x128xbf16, #tpu.memory_space<vmem>>, vector<250x128xbf16>
    %cst = arith.constant dense<0.000000e+00> : vector<128x128xf32>
    %3 = tpu.matmul %1, %2, %cst {dimension_numbers = #tpu.dot_dimension_numbers<[1], [0], [0], [1], [0, 0, 1, 1], [], []>} : vector<128x250xbf16>, vector<250x128xbf16>, vector<128x128xf32> -> vector<128x128xf32>
    %c0_3 = arith.constant 0 : index
    %c0_4 = arith.constant 0 : index
    %4 = vector.load %arg3[%c0_3, %c0_4] : memref<1x128xf32, #tpu.memory_space<vmem>>, vector<1x128xf32>
    %5 = vector.broadcast %4 : vector<1x128xf32> to vector<128x128xf32>
    %6 = arith.addf %3, %5 : vector<128x128xf32>
    %7 = math.tanh %6 : vector<128x128xf32>
    %8 = arith.truncf %7 : vector<128x128xf32> to vector<128x128xbf16>
    %c0_5 = arith.constant 0 : index
    %c0_6 = arith.constant 0 : index
    %9 = vector.load %arg4[%c0_5, %c0_6] : memref<128x128xbf16, #tpu.memory_space<vmem>>, vector<128x128xbf16>
    %cst_7 = arith.constant dense<0.000000e+00> : vector<128x128xf32>
    %10 = tpu.matmul %8, %9, %cst_7 {dimension_numbers = #tpu.dot_dimension_numbers<[1], [0], [0], [1], [0, 0, 1, 1], [], []>} : vector<128x128xbf16>, vector<128x128xbf16>, vector<128x128xf32> -> vector<128x128xf32>
    %c0_8 = arith.constant 0 : index
    %c0_9 = arith.constant 0 : index
    %11 = vector.load %arg5[%c0_8, %c0_9] : memref<1x128xf32, #tpu.memory_space<vmem>>, vector<1x128xf32>
    %12 = vector.broadcast %11 : vector<1x128xf32> to vector<128x128xf32>
    %13 = arith.addf %10, %12 : vector<128x128xf32>
    %14 = math.tanh %13 : vector<128x128xf32>
    %c0_10 = arith.constant 0 : index
    %c0_11 = arith.constant 0 : index
    %15 = vector.load %arg6[%c0_10, %c0_11] : memref<1x128xf32, #tpu.memory_space<vmem>>, vector<1x128xf32>
    %16 = vector.broadcast %15 : vector<1x128xf32> to vector<128x128xf32>
    %17 = arith.mulf %14, %16 : vector<128x128xf32>
    %cst_12 = arith.constant dense<0.000000e+00> : vector<128xf32>
    %18 = vector.multi_reduction <add>, %17, %cst_12 [1] : vector<128x128xf32> to vector<128xf32>
    %19 = vector.shape_cast %18 : vector<128xf32> to vector<128x1xf32>
    %c0_13 = arith.constant 0 : index
    %c0_14 = arith.constant 0 : index
    %20 = vector.load %arg7[%c0_13, %c0_14] : memref<1x1xf32, #tpu.memory_space<vmem>>, vector<1x1xf32>
    %21 = vector.broadcast %20 : vector<1x1xf32> to vector<128x1xf32>
    %22 = arith.addf %19, %21 : vector<128x1xf32>
    %23 = arith.negf %22 : vector<128x1xf32>
    %24 = math.exp %23 : vector<128x1xf32>
    %cst_15 = arith.constant 1.000000e+00 : f32
    %25 = vector.broadcast %cst_15 : f32 to vector<128x1xf32>
    %26 = arith.addf %25, %24 : vector<128x1xf32>
    %27 = arith.divf %25, %26 : vector<128x1xf32>
    %c0_16 = arith.constant 0 : index
    %c0_17 = arith.constant 0 : index
    %28 = vector.load %arg8[%c0_16, %c0_17] : memref<128x1xf32, #tpu.memory_space<vmem>>, vector<128x1xf32>
    tpu.vector_store %arg8[%c0_16, %c0_17], %27 {strides = array<i32>} : memref<128x1xf32, #tpu.memory_space<vmem>>, vector<128x1xf32>,
    return
  }
  func.func @transform_0(%arg0: i32) -> (i32, i32) {
    %c0_i32 = arith.constant 0 : i32
    %c0_i32_0 = arith.constant 0 : i32
    return %arg0, %c0_i32 : i32, i32
  }
  func.func @transform_1(%arg0: i32) -> (i32, i32) {
    %c0_i32 = arith.constant 0 : i32
    %c0_i32_0 = arith.constant 0 : i32
    %c0_i32_1 = arith.constant 0 : i32
    return %c0_i32, %c0_i32_0 : i32, i32
  }
  func.func @transform_2(%arg0: i32) -> (i32, i32) {
    %c0_i32 = arith.constant 0 : i32
    %c0_i32_0 = arith.constant 0 : i32
    %c0_i32_1 = arith.constant 0 : i32
    return %c0_i32, %c0_i32_0 : i32, i32
  }
  func.func @transform_3(%arg0: i32) -> (i32, i32) {
    %c0_i32 = arith.constant 0 : i32
    %c0_i32_0 = arith.constant 0 : i32
    %c0_i32_1 = arith.constant 0 : i32
    return %c0_i32, %c0_i32_0 : i32, i32
  }
  func.func @transform_4(%arg0: i32) -> (i32, i32) {
    %c0_i32 = arith.constant 0 : i32
    %c0_i32_0 = arith.constant 0 : i32
    %c0_i32_1 = arith.constant 0 : i32
    return %c0_i32, %c0_i32_0 : i32, i32
  }
  func.func @transform_5(%arg0: i32) -> (i32, i32) {
    %c0_i32 = arith.constant 0 : i32
    %c0_i32_0 = arith.constant 0 : i32
    %c0_i32_1 = arith.constant 0 : i32
    return %c0_i32, %c0_i32_0 : i32, i32
  }
  func.func @transform_6(%arg0: i32) -> (i32, i32) {
    %c0_i32 = arith.constant 0 : i32
    %c0_i32_0 = arith.constant 0 : i32
    %c0_i32_1 = arith.constant 0 : i32
    return %c0_i32, %c0_i32_0 : i32, i32
  }
  func.func @transform_7(%arg0: i32) -> (i32, i32) {
    %c0_i32 = arith.constant 0 : i32
    %c0_i32_0 = arith.constant 0 : i32
    return %arg0, %c0_i32 : i32, i32
  }
}

</mosaic_0001>

<llo_original>
// kernel: mlp_forward.1
$region0: #{mlp_forward.1}
  #allocation0 [shape = 'u32[]', space=smem, size = 0x4, offset = 0x4, fixed_abs, tag = 'smem constant byte address 0x4 - core index']
  #allocation1 [shape = 'u32[144,128]{1,0:T(1,128)}', space=vmem, size = 0x12000, scoped, tag = 'internal scratch']
  #allocation2 [shape = 'f32[1,1]{1,0:T(1,128)S(1)}', space=vmem, size = 0x200, scoped, tag = 'scoped memory for mlp_forward.1']
  %s0 = inlined_call_operand.vmem [shape: f32[8,250], index: 0, kind: input, shape index: {}]
  %s1 = inlined_call_operand.vmem [shape: bf16[250,128], index: 1, kind: input, shape index: {}]
  %s2 = inlined_call_operand.vmem [shape: f32[1,128], index: 2, kind: input, shape index: {}]
  %s3 = inlined_call_operand.vmem [shape: bf16[128,128], index: 3, kind: input, shape index: {}]
  %s4 = inlined_call_operand.vmem [shape: f32[1,128], index: 4, kind: input, shape index: {}]
  %s5 = inlined_call_operand.vmem [shape: f32[1,128], index: 5, kind: input, shape index: {}]
  %s6 = inlined_call_operand.<no memory space> [shape: f32[1,1], index: 6, kind: input, shape index: {}]
  %s7 = inlined_call_operand.vmem [shape: f32[8,1], index: 7, kind: output, shape index: {}]
  %s8 = sld [smem:[#allocation0]]
  $region72: #{mlp_forward.1} parent=0
    _
  %s10 = ssub.s32 1, %s8
  %s11 = scalar_select 0, %s10, %s8
  %v12 = vstv %s6
  %13 = vst [vmem:[#allocation2] sm:$0x1] %v12
  $region1: #{mlp_forward.1} parent=0
    #allocation3 [shape = 'u8[65536]{0}', space=vmem, size = 0x10000, scoped, tag = 'output window, operand 0, single buffered']
    // Predicated region
    $region2: #{mlp_forward.1} parent=1 // pred_check
      _
    $region3: #{mlp_forward.1} parent=1 // pred_check_branch
      %15 = sbr.rel (0) target = $region5
    $region4: #{mlp_forward.1} parent=1 // pred_region
      _
    $region5: #{mlp_forward.1} parent=1 // pred_fallthru
      _
    // Predicated region
    $region6: #{mlp_forward.1} parent=1 // pred_check
      _
    $region7: #{mlp_forward.1} parent=1 // pred_check_branch
      %17 = sbr.rel (0) target = $region9
    $region8: #{mlp_forward.1} parent=1 // pred_region
      _
    $region9: #{mlp_forward.1} parent=1 // pred_fallthru
      _
    // Predicated region
    $region10: #{mlp_forward.1} parent=1 // pred_check
      _
    $region11: #{mlp_forward.1} parent=1 // pred_check_branch
      %19 = sbr.rel (0) target = $region13
    $region12: #{mlp_forward.1} parent=1 // pred_region
      _
    $region13: #{mlp_forward.1} parent=1 // pred_fallthru
      _
    // Predicated region
    $region14: #{mlp_forward.1} parent=1 // pred_check
      _
    $region15: #{mlp_forward.1} parent=1 // pred_check_branch
      %21 = sbr.rel (0) target = $region17
    $region16: #{mlp_forward.1} parent=1 // pred_region
      _
    $region17: #{mlp_forward.1} parent=1 // pred_fallthru
      _
    // Predicated region
    $region18: #{mlp_forward.1} parent=1 // pred_check
      _
    $region19: #{mlp_forward.1} parent=1 // pred_check_branch
      %23 = sbr.rel (0) target = $region21
    $region20: #{mlp_forward.1} parent=1 // pred_region
      _
    $region21: #{mlp_forward.1} parent=1 // pred_fallthru
      _
    // Predicated region
    $region22: #{mlp_forward.1} parent=1 // pred_check
      _
    $region23: #{mlp_forward.1} parent=1 // pred_check_branch
      %25 = sbr.rel (0) target = $region25
    $region24: #{mlp_forward.1} parent=1 // pred_region
      _
    $region25: #{mlp_forward.1} parent=1 // pred_fallthru
      _
    // Predicated region
    $region26: #{mlp_forward.1} parent=1 // pred_check
      _
    $region27: #{mlp_forward.1} parent=1 // pred_check_branch
      %27 = sbr.rel (0) target = $region29
    $region28: #{mlp_forward.1} parent=1 // pred_region
      _
    $region29: #{mlp_forward.1} parent=1 // pred_fallthru
      _
    %v29 = vld [vmem:[%s0] sm:$0xff]
    %v30 = vld [vmem:[%s0 + $0x8] sm:$0xff]
    %v31 = vld [vmem:[%s0 + $0x10] sm:$0xff]
    %v32 = vld [vmem:[%s0 + $0x18] sm:$0xff]
    %v33 = vld [vmem:[%s0 + $0x20] sm:$0xff]
    %v34 = vld [vmem:[%s0 + $0x28] sm:$0xff]
    %v35 = vld [vmem:[%s0 + $0x30] sm:$0xff]
    %v36 = vld [vmem:[%s0 + $0x38] sm:$0xff]
    %v37 = vld [vmem:[%s0 + $0x40] sm:$0xff]
    %v38 = vld [vmem:[%s0 + $0x48] sm:$0xff]
    %v39 = vld [vmem:[%s0 + $0x50] sm:$0xff]
    %v40 = vld [vmem:[%s0 + $0x58] sm:$0xff]
    %v41 = vld [vmem:[%s0 + $0x60] sm:$0xff]
    %v42 = vld [vmem:[%s0 + $0x68] sm:$0xff]
    %v43 = vld [vmem:[%s0 + $0x70] sm:$0xff]
    %v44 = vld [vmem:[%s0 + $0x78] sm:$0xff]
    %v45 = vld [vmem:[%s0 + $0x80] sm:$0xff]
    %v46 = vld [vmem:[%s0 + $0x88] sm:$0xff]
    %v47 = vld [vmem:[%s0 + $0x90] sm:$0xff]
    %v48 = vld [vmem:[%s0 + $0x98] sm:$0xff]
    %v49 = vld [vmem:[%s0 + $0xa0] sm:$0xff]
    %v50 = vld [vmem:[%s0 + $0xa8] sm:$0xff]
    %v51 = vld [vmem:[%s0 + $0xb0] sm:$0xff]
    %v52 = vld [vmem:[%s0 + $0xb8] sm:$0xff]
    %v53 = vld [vmem:[%s0 + $0xc0] sm:$0xff]
    %v54 = vld [vmem:[%s0 + $0xc8] sm:$0xff]
    %v55 = vld [vmem:[%s0 + $0xd0] sm:$0xff]
    %v56 = vld [vmem:[%s0 + $0xd8] sm:$0xff]
    %v57 = vld [vmem:[%s0 + $0xe0] sm:$0xff]
    %v58 = vld [vmem:[%s0 + $0xe8] sm:$0xff]
    %v59 = vld [vmem:[%s0 + $0xf0] sm:$0xff]
    %v60 = vld [vmem:[%s0 + $0xf8] sm:$0xff]
    %v61 = vpack.c.bf16 %v31, %v29
    %v62 = vpack.c.bf16 %v32, %v30
    %v63 = vpack.c.bf16 %v35, %v33
    %v64 = vpack.c.bf16 %v36, %v34
    %v65 = vpack.c.bf16 %v39, %v37
    %v66 = vpack.c.bf16 %v40, %v38
    %v67 = vpack.c.bf16 %v43, %v41
    %v68 = vpack.c.bf16 %v44, %v42
    %v69 = vpack.c.bf16 %v47, %v45
    %v70 = vpack.c.bf16 %v48, %v46
    %v71 = vpack.c.bf16 %v51, %v49
    %v72 = vpack.c.bf16 %v52, %v50
    %v73 = vpack.c.bf16 %v55, %v53
    %v74 = vpack.c.bf16 %v56, %v54
    %v75 = vpack.c.bf16 %v59, %v57
    %v76 = vpack.c.bf16 %v60, %v58
    %v77 = vld [vmem:[%s1] sm:$0xf]
    %v78 = vld [vmem:[%s1 + $0x4] sm:$0xf]
    %v79 = vld [vmem:[%s1 + $0x8] sm:$0xf]
    %v80 = vld [vmem:[%s1 + $0xc] sm:$0xf]
    %v81 = vld [vmem:[%s1 + $0x10] sm:$0xf]
    %v82 = vld [vmem:[%s1 + $0x14] sm:$0xf]
    %v83 = vld [vmem:[%s1 + $0x18] sm:$0xf]
    %v84 = vld [vmem:[%s1 + $0x1c] sm:$0xf]
    %v85 = vld [vmem:[%s1 + $0x20] sm:$0xf]
    %v86 = vld [vmem:[%s1 + $0x24] sm:$0xf]
    %v87 = vld [vmem:[%s1 + $0x28] sm:$0xf]
    %v88 = vld [vmem:[%s1 + $0x2c] sm:$0xf]
    %v89 = vld [vmem:[%s1 + $0x30] sm:$0xf]
    %v90 = vld [vmem:[%s1 + $0x34] sm:$0xf]
    %v91 = vld [vmem:[%s1 + $0x38] sm:$0xf]
    %v92 = vld [vmem:[%s1 + $0x3c] sm:$0xf]
    %v93 = vld [vmem:[%s1 + $0x40] sm:$0xf]
    %v94 = vld [vmem:[%s1 + $0x44] sm:$0xf]
    %v95 = vld [vmem:[%s1 + $0x48] sm:$0xf]
    %v96 = vld [vmem:[%s1 + $0x4c] sm:$0xf]
    %v97 = vld [vmem:[%s1 + $0x50] sm:$0xf]
    %v98 = vld [vmem:[%s1 + $0x54] sm:$0xf]
    %v99 = vld [vmem:[%s1 + $0x58] sm:$0xf]
    %v100 = vld [vmem:[%s1 + $0x5c] sm:$0xf]
    %v101 = vld [vmem:[%s1 + $0x60] sm:$0xf]
    %v102 = vld [vmem:[%s1 + $0x64] sm:$0xf]
    %v103 = vld [vmem:[%s1 + $0x68] sm:$0xf]
    %v104 = vld [vmem:[%s1 + $0x6c] sm:$0xf]
    %v105 = vld [vmem:[%s1 + $0x70] sm:$0xf]
    %v106 = vld [vmem:[%s1 + $0x74] sm:$0xf]
    %v107 = vld [vmem:[%s1 + $0x78] sm:$0xf]
    %v108 = vld [vmem:[%s1 + $0x7c] sm:$0x1]
    %v109 = vld [vmem:[%s2] sm:$0x1]
    %v111 = vlaneseq
    %v112 = vshrl.u32 %v111, 7
    %v113 = vsub.s32 0, %v112
    %v114 = vrot.slane %v109, %v113
    %v148 = vunpack.c.l.b16 %v77
    %v149 = vunpack.c.l.b16 %v78
    %v150 = vunpack.c.l.b16 %v79
    %v151 = vunpack.c.l.b16 %v80
    %v152 = vunpack.c.l.b16 %v81
    %v153 = vunpack.c.l.b16 %v82
    %v154 = vunpack.c.l.b16 %v83
    %v155 = vunpack.c.l.b16 %v84
    %v156 = vunpack.c.l.b16 %v85
    %v157 = vunpack.c.l.b16 %v86
    %v158 = vunpack.c.l.b16 %v87
    %v159 = vunpack.c.l.b16 %v88
    %v160 = vunpack.c.l.b16 %v89
    %v161 = vunpack.c.l.b16 %v90
    %v162 = vunpack.c.l.b16 %v91
    %v163 = vunpack.c.l.b16 %v92
    %v164 = vunpack.c.l.b16 %v93
    %v165 = vunpack.c.l.b16 %v94
    %v166 = vunpack.c.l.b16 %v95
    %v167 = vunpack.c.l.b16 %v96
    %v168 = vunpack.c.l.b16 %v97
    %v169 = vunpack.c.l.b16 %v98
    %v170 = vunpack.c.l.b16 %v99
    %v171 = vunpack.c.l.b16 %v100
    %v172 = vunpack.c.l.b16 %v101
    %v173 = vunpack.c.l.b16 %v102
    %v174 = vunpack.c.l.b16 %v103
    %v175 = vunpack.c.l.b16 %v104
    %v176 = vunpack.c.l.b16 %v105
    %v177 = vunpack.c.l.b16 %v106
    %v178 = vunpack.c.l.b16 %v107
    %v179 = vunpack.c.l.b16 %v108
    %v180 = vpack.c.b16 %v149, %v148
    %v181 = vpack.c.b16 %v151, %v150
    %v182 = vpack.c.b16 %v153, %v152
    %v183 = vpack.c.b16 %v155, %v154
    %v184 = vpack.c.b16 %v157, %v156
    %v185 = vpack.c.b16 %v159, %v158
    %v186 = vpack.c.b16 %v161, %v160
    %v187 = vpack.c.b16 %v163, %v162
    %v188 = vpack.c.b16 %v165, %v164
    %v189 = vpack.c.b16 %v167, %v166
    %v190 = vpack.c.b16 %v169, %v168
    %v191 = vpack.c.b16 %v171, %v170
    %v192 = vpack.c.b16 %v173, %v172
    %v193 = vpack.c.b16 %v175, %v174
    %v194 = vpack.c.b16 %v177, %v176
    %v195 = vpack.c.b16 %v179, %v178
    %vm211 = vcmask 998400
    %v213 = vsel %vm211, %v62, 0
    %v216 = vsel %vm211, %v64, 0
    %v219 = vsel %vm211, %v66, 0
    %v222 = vsel %vm211, %v68, 0
    %v225 = vsel %vm211, %v70, 0
    %v228 = vsel %vm211, %v72, 0
    %v231 = vsel %vm211, %v74, 0
    %v234 = vsel %vm211, %v76, 0
    %vm236 = vcmask 1044480
    %v238 = vsel %vm236, %v195, 0
    %240 = vmatprep.subr.bf16.mxu0 0
    %241 = vmatpush1.bf16.msra.mxu0 %v180
    %242 = vmatprep.subr.bf16.mxu0 0
    %243 = vmatpush1.bf16.msra.mxu0 %v181
    %244 = vmatprep.subr.bf16.mxu0 0
    %245 = vmatpush1.bf16.msra.mxu0 %v182
    %246 = vmatprep.subr.bf16.mxu0 0
    %247 = vmatpush1.bf16.msra.mxu0 %v183
    %248 = vmatprep.subr.bf16.mxu0 0
    %249 = vmatpush1.bf16.msra.mxu0 %v184
    %250 = vmatprep.subr.bf16.mxu0 0
    %251 = vmatpush1.bf16.msra.mxu0 %v185
    %252 = vmatprep.subr.bf16.mxu0 0
    %253 = vmatpush1.bf16.msra.mxu0 %v186
    %254 = vmatprep.subr.bf16.mxu0 0
    %255 = vmatpush1.bf16.msra.mxu0 %v187
    %256 = vmatprep.subr.bf16.mxu0 0
    %257 = vmatpush1.bf16.msra.mxu0 %v188
    %258 = vmatprep.subr.bf16.mxu0 0
    %259 = vmatpush1.bf16.msra.mxu0 %v189
    %260 = vmatprep.subr.bf16.mxu0 0
    %261 = vmatpush1.bf16.msra.mxu0 %v190
    %262 = vmatprep.subr.bf16.mxu0 0
    %263 = vmatpush1.bf16.msra.mxu0 %v191
    %264 = vmatprep.subr.bf16.mxu0 0
    %265 = vmatpush1.bf16.msra.mxu0 %v192
    %266 = vmatprep.subr.bf16.mxu0 0
    %267 = vmatpush1.bf16.msra.mxu0 %v193
    %268 = vmatprep.subr.bf16.mxu0 0
    %269 = vmatpush1.bf16.msra.mxu0 %v194
    %270 = vmatprep.subr.bf16.mxu0 0
    %271 = vmatpush1.bf16.msra.mxu0 %v238
    %272 = vmatprep.mubr.bf16.mxu0 %v213
    %273 = vmatmul.mubr.bf16.gmra.mrb[0].mxu0 %v61
    %v274 = vpop.f32.mrb[0].mxu0
    %v275 = vadd.f32 %v114, %v274
    %v276 = vpop.f32.mrb[0].mxu0
    %v277 = vpop.f32.mrb[0].mxu0
    %v278 = vadd.f32 %v114, %v277
    %v279 = vpop.f32.mrb[0].mxu0
    %280 = vmatprep.mubr.bf16.mxu0 %v216
    %281 = vmatmul.mubr.bf16.gmra.mrb[0].mxu0 %v63
    %v282 = vpop.f32.mrb[0].mxu0
    %v283 = vadd.f32 %v114, %v282
    %v284 = vpop.f32.mrb[0].mxu0
    %v285 = vpop.f32.mrb[0].mxu0
    %v286 = vadd.f32 %v114, %v285
    %v287 = vpop.f32.mrb[0].mxu0
    %288 = vmatprep.mubr.bf16.mxu0 %v219
    %289 = vmatmul.mubr.bf16.gmra.mrb[0].mxu0 %v65
    %v290 = vpop.f32.mrb[0].mxu0
    %v291 = vadd.f32 %v114, %v290
    %v292 = vpop.f32.mrb[0].mxu0
    %v293 = vpop.f32.mrb[0].mxu0
    %v294 = vadd.f32 %v114, %v293
    %v295 = vpop.f32.mrb[0].mxu0
    %296 = vmatprep.mubr.bf16.mxu0 %v222
    %297 = vmatmul.mubr.bf16.gmra.mrb[0].mxu0 %v67
    %v298 = vpop.f32.mrb[0].mxu0
    %v299 = vadd.f32 %v114, %v298
    %v300 = vpop.f32.mrb[0].mxu0
    %v301 = vpop.f32.mrb[0].mxu0
    %v302 = vadd.f32 %v114, %v301
    %v303 = vpop.f32.mrb[0].mxu0
    %304 = vmatprep.mubr.bf16.mxu0 %v225
    %305 = vmatmul.mubr.bf16.gmra.mrb[0].mxu0 %v69
    %v306 = vpop.f32.mrb[0].mxu0
    %v307 = vadd.f32 %v114, %v306
    %v308 = vpop.f32.mrb[0].mxu0
    %v309 = vpop.f32.mrb[0].mxu0
    %v310 = vadd.f32 %v114, %v309
    %v311 = vpop.f32.mrb[0].mxu0
    %312 = vmatprep.mubr.bf16.mxu0 %v228
    %313 = vmatmul.mubr.bf16.gmra.mrb[0].mxu0 %v71
    %v314 = vpop.f32.mrb[0].mxu0
    %v315 = vadd.f32 %v114, %v314
    %v316 = vpop.f32.mrb[0].mxu0
    %v317 = vpop.f32.mrb[0].mxu0
    %v318 = vadd.f32 %v114, %v317
    %v319 = vpop.f32.mrb[0].mxu0
    %320 = vmatprep.mubr.bf16.mxu0 %v231
    %321 = vmatmul.mubr.bf16.gmra.mrb[0].mxu0 %v73
    %v322 = vpop.f32.mrb[0].mxu0
    %v323 = vadd.f32 %v114, %v322
    %v324 = vpop.f32.mrb[0].mxu0
    %v325 = vpop.f32.mrb[0].mxu0
    %v326 = vadd.f32 %v114, %v325
    %v327 = vpop.f32.mrb[0].mxu0
    %328 = vmatprep.mubr.bf16.mxu0 %v234
    %329 = vmatmul.mubr.bf16.gmra.mrb[0].mxu0 %v75
    %v330 = vpop.f32.mrb[0].mxu0
    %v331 = vadd.f32 %v114, %v330
    %v332 = vpop.f32.mrb[0].mxu0
    %v333 = vpop.f32.mrb[0].mxu0
    %v334 = vadd.f32 %v114, %v333
    %v335 = vpop.f32.mrb[0].mxu0
    %336 = vdwg.mxu0
    %v337 = vtanh.pop %v275
    %v338 = vtanh.pop %v278
    %v339 = vtanh.pop %v283
    %v340 = vtanh.pop %v286
    %v341 = vtanh.pop %v291
    %v342 = vtanh.pop %v294
    %v343 = vtanh.pop %v299
    %v344 = vtanh.pop %v302
    %v345 = vtanh.pop %v307
    %v346 = vtanh.pop %v310
    %v347 = vtanh.pop %v315
    %v348 = vtanh.pop %v318
    %v349 = vtanh.pop %v323
    %v350 = vtanh.pop %v326
    %v351 = vtanh.pop %v331
    %v352 = vtanh.pop %v334
    %v353 = vpack.c.bf16 %v338, %v337
    %v354 = vpack.c.bf16 %v340, %v339
    %v355 = vpack.c.bf16 %v342, %v341
    %v356 = vpack.c.bf16 %v344, %v343
    %v357 = vpack.c.bf16 %v346, %v345
    %v358 = vpack.c.bf16 %v348, %v347
    %v359 = vpack.c.bf16 %v350, %v349
    %v360 = vpack.c.bf16 %v352, %v351
    %v361 = vld [vmem:[%s3] sm:$0xf]
    %v362 = vld [vmem:[%s3 + $0x4] sm:$0xf]
    %v363 = vld [vmem:[%s3 + $0x8] sm:$0xf]
    %v364 = vld [vmem:[%s3 + $0xc] sm:$0xf]
    %v365 = vld [vmem:[%s3 + $0x10] sm:$0xf]
    %v366 = vld [vmem:[%s3 + $0x14] sm:$0xf]
    %v367 = vld [vmem:[%s3 + $0x18] sm:$0xf]
    %v368 = vld [vmem:[%s3 + $0x1c] sm:$0xf]
    %v369 = vld [vmem:[%s3 + $0x20] sm:$0xf]
    %v370 = vld [vmem:[%s3 + $0x24] sm:$0xf]
    %v371 = vld [vmem:[%s3 + $0x28] sm:$0xf]
    %v372 = vld [vmem:[%s3 + $0x2c] sm:$0xf]
    %v373 = vld [vmem:[%s3 + $0x30] sm:$0xf]
    %v374 = vld [vmem:[%s3 + $0x34] sm:$0xf]
    %v375 = vld [vmem:[%s3 + $0x38] sm:$0xf]
    %v376 = vld [vmem:[%s3 + $0x3c] sm:$0xf]
    %v377 = vld [vmem:[%s4] sm:$0x1]
    %v379 = vlaneseq
    %v380 = vshrl.u32 %v379, 7
    %v381 = vsub.s32 0, %v380
    %v382 = vrot.slane %v377, %v381
    %v400 = vunpack.c.l.b16 %v361
    %v401 = vunpack.c.l.b16 %v362
    %v402 = vunpack.c.l.b16 %v363
    %v403 = vunpack.c.l.b16 %v364
    %v404 = vunpack.c.l.b16 %v365
    %v405 = vunpack.c.l.b16 %v366
    %v406 = vunpack.c.l.b16 %v367
    %v407 = vunpack.c.l.b16 %v368
    %v408 = vunpack.c.l.b16 %v369
    %v409 = vunpack.c.l.b16 %v370
    %v410 = vunpack.c.l.b16 %v371
    %v411 = vunpack.c.l.b16 %v372
    %v412 = vunpack.c.l.b16 %v373
    %v413 = vunpack.c.l.b16 %v374
    %v414 = vunpack.c.l.b16 %v375
    %v415 = vunpack.c.l.b16 %v376
    %v416 = vpack.c.b16 %v401, %v400
    %v417 = vpack.c.b16 %v403, %v402
    %v418 = vpack.c.b16 %v405, %v404
    %v419 = vpack.c.b16 %v407, %v406
    %v420 = vpack.c.b16 %v409, %v408
    %v421 = vpack.c.b16 %v411, %v410
    %v422 = vpack.c.b16 %v413, %v412
    %v423 = vpack.c.b16 %v415, %v414
    %432 = vmatprep.subr.bf16.mxu0 0
    %433 = vmatpush1.bf16.msra.mxu0 %v416
    %434 = vmatprep.subr.bf16.mxu0 0
    %435 = vmatpush1.bf16.msra.mxu0 %v417
    %436 = vmatprep.subr.bf16.mxu0 0
    %437 = vmatpush1.bf16.msra.mxu0 %v418
    %438 = vmatprep.subr.bf16.mxu0 0
    %439 = vmatpush1.bf16.msra.mxu0 %v419
    %440 = vmatprep.subr.bf16.mxu0 0
    %441 = vmatpush1.bf16.msra.mxu0 %v420
    %442 = vmatprep.subr.bf16.mxu0 0
    %443 = vmatpush1.bf16.msra.mxu0 %v421
    %444 = vmatprep.subr.bf16.mxu0 0
    %445 = vmatpush1.bf16.msra.mxu0 %v422
    %446 = vmatprep.subr.bf16.mxu0 0
    %447 = vmatpush1.bf16.msra.mxu0 %v423
    %448 = vmatprep.subr.bf16.mxu0 0
    %449 = vmatpush1.bf16.msra.mxu0 0
    %450 = vmatprep.subr.bf16.mxu0 0
    %451 = vmatpush1.bf16.msra.mxu0 0
    %452 = vmatprep.subr.bf16.mxu0 0
    %453 = vmatpush1.bf16.msra.mxu0 0
    %454 = vmatprep.subr.bf16.mxu0 0
    %455 = vmatpush1.bf16.msra.mxu0 0
    %456 = vmatprep.subr.bf16.mxu0 0
    %457 = vmatpush1.bf16.msra.mxu0 0
    %458 = vmatprep.subr.bf16.mxu0 0
    %459 = vmatpush1.bf16.msra.mxu0 0
    %460 = vmatprep.subr.bf16.mxu0 0
    %461 = vmatpush1.bf16.msra.mxu0 0
    %462 = vmatprep.subr.bf16.mxu0 0
    %463 = vmatpush1.bf16.msra.mxu0 0
    %464 = vmatprep.mubr.bf16.mxu0 0
    %465 = vmatmul.mubr.bf16.gmra.mrb[0].mxu0 %v353
    %v466 = vpop.f32.mrb[0].mxu0
    %v467 = vadd.f32 %v382, %v466
    %v468 = vpop.f32.mrb[0].mxu0
    %v469 = vpop.f32.mrb[0].mxu0
    %v470 = vadd.f32 %v382, %v469
    %v471 = vpop.f32.mrb[0].mxu0
    %472 = vmatprep.mubr.bf16.mxu0 0
    %473 = vmatmul.mubr.bf16.gmra.mrb[0].mxu0 %v354
    %v474 = vpop.f32.mrb[0].mxu0
    %v475 = vadd.f32 %v382, %v474
    %v476 = vpop.f32.mrb[0].mxu0
    %v477 = vpop.f32.mrb[0].mxu0
    %v478 = vadd.f32 %v382, %v477
    %v479 = vpop.f32.mrb[0].mxu0
    %480 = vmatprep.mubr.bf16.mxu0 0
    %481 = vmatmul.mubr.bf16.gmra.mrb[0].mxu0 %v355
    %v482 = vpop.f32.mrb[0].mxu0
    %v483 = vadd.f32 %v382, %v482
    %v484 = vpop.f32.mrb[0].mxu0
    %v485 = vpop.f32.mrb[0].mxu0
    %v486 = vadd.f32 %v382, %v485
    %v487 = vpop.f32.mrb[0].mxu0
    %488 = vmatprep.mubr.bf16.mxu0 0
    %489 = vmatmul.mubr.bf16.gmra.mrb[0].mxu0 %v356
    %v490 = vpop.f32.mrb[0].mxu0
    %v491 = vadd.f32 %v382, %v490
    %v492 = vpop.f32.mrb[0].mxu0
    %v493 = vpop.f32.mrb[0].mxu0
    %v494 = vadd.f32 %v382, %v493
    %v495 = vpop.f32.mrb[0].mxu0
    %496 = vmatprep.mubr.bf16.mxu0 0
    %497 = vmatmul.mubr.bf16.gmra.mrb[0].mxu0 %v357
    %v498 = vpop.f32.mrb[0].mxu0
    %v499 = vadd.f32 %v382, %v498
    %v500 = vpop.f32.mrb[0].mxu0
    %v501 = vpop.f32.mrb[0].mxu0
    %v502 = vadd.f32 %v382, %v501
    %v503 = vpop.f32.mrb[0].mxu0
    %504 = vmatprep.mubr.bf16.mxu0 0
    %505 = vmatmul.mubr.bf16.gmra.mrb[0].mxu0 %v358
    %v506 = vpop.f32.mrb[0].mxu0
    %v507 = vadd.f32 %v382, %v506
    %v508 = vpop.f32.mrb[0].mxu0
    %v509 = vpop.f32.mrb[0].mxu0
    %v510 = vadd.f32 %v382, %v509
    %v511 = vpop.f32.mrb[0].mxu0
    %512 = vmatprep.mubr.bf16.mxu0 0
    %513 = vmatmul.mubr.bf16.gmra.mrb[0].mxu0 %v359
    %v514 = vpop.f32.mrb[0].mxu0
    %v515 = vadd.f32 %v382, %v514
    %v516 = vpop.f32.mrb[0].mxu0
    %v517 = vpop.f32.mrb[0].mxu0
    %v518 = vadd.f32 %v382, %v517
    %v519 = vpop.f32.mrb[0].mxu0
    %520 = vmatprep.mubr.bf16.mxu0 0
    %521 = vmatmul.mubr.bf16.gmra.mrb[0].mxu0 %v360
    %v522 = vpop.f32.mrb[0].mxu0
    %v523 = vadd.f32 %v382, %v522
    %v524 = vpop.f32.mrb[0].mxu0
    %v525 = vpop.f32.mrb[0].mxu0
    %v526 = vadd.f32 %v382, %v525
    %v527 = vpop.f32.mrb[0].mxu0
    %528 = vdwg.mxu0
    %v529 = vtanh.pop %v467
    %v530 = vtanh.pop %v470
    %v531 = vtanh.pop %v475
    %v532 = vtanh.pop %v478
    %v533 = vtanh.pop %v483
    %v534 = vtanh.pop %v486
    %v535 = vtanh.pop %v491
    %v536 = vtanh.pop %v494
    %v537 = vtanh.pop %v499
    %v538 = vtanh.pop %v502
    %v539 = vtanh.pop %v507
    %v540 = vtanh.pop %v510
    %v541 = vtanh.pop %v515
    %v542 = vtanh.pop %v518
    %v543 = vtanh.pop %v523
    %v544 = vtanh.pop %v526
    %v545 = vld [vmem:[%s5] sm:$0x1]
    %v547 = vlaneseq
    %v548 = vshrl.u32 %v547, 7
    %v549 = vsub.s32 0, %v548
    %v550 = vrot.slane %v545, %v549
    %v552 = vmul.f32 %v529, %v550
    %v553 = vmul.f32 %v530, %v550
    %v554 = vmul.f32 %v531, %v550
    %v555 = vmul.f32 %v532, %v550
    %v556 = vmul.f32 %v533, %v550
    %v557 = vmul.f32 %v534, %v550
    %v558 = vmul.f32 %v535, %v550
    %v559 = vmul.f32 %v536, %v550
    %v560 = vmul.f32 %v537, %v550
    %v561 = vmul.f32 %v538, %v550
    %v562 = vmul.f32 %v539, %v550
    %v563 = vmul.f32 %v540, %v550
    %v564 = vmul.f32 %v541, %v550
    %v565 = vmul.f32 %v542, %v550
    %v566 = vmul.f32 %v543, %v550
    %v567 = vmul.f32 %v544, %v550
    %568 = vadd.xlane.f32.xlu0 %v552
    %v569 = vpop.xlane.xlu0 %568
    %570 = vadd.xlane.f32.xlu0 %v553
    %v571 = vpop.xlane.xlu0 %570
    %572 = vadd.xlane.f32.xlu0 %v554
    %v573 = vpop.xlane.xlu0 %572
    %574 = vadd.xlane.f32.xlu0 %v555
    %v575 = vpop.xlane.xlu0 %574
    %576 = vadd.xlane.f32.xlu0 %v556
    %v577 = vpop.xlane.xlu0 %576
    %578 = vadd.xlane.f32.xlu0 %v557
    %v579 = vpop.xlane.xlu0 %578
    %580 = vadd.xlane.f32.xlu0 %v558
    %v581 = vpop.xlane.xlu0 %580
    %582 = vadd.xlane.f32.xlu0 %v559
    %v583 = vpop.xlane.xlu0 %582
    %584 = vadd.xlane.f32.xlu0 %v560
    %v585 = vpop.xlane.xlu0 %584
    %586 = vadd.xlane.f32.xlu0 %v561
    %v587 = vpop.xlane.xlu0 %586
    %588 = vadd.xlane.f32.xlu0 %v562
    %v589 = vpop.xlane.xlu0 %588
    %590 = vadd.xlane.f32.xlu0 %v563
    %v591 = vpop.xlane.xlu0 %590
    %592 = vadd.xlane.f32.xlu0 %v564
    %v593 = vpop.xlane.xlu0 %592
    %594 = vadd.xlane.f32.xlu0 %v565
    %v595 = vpop.xlane.xlu0 %594
    %596 = vadd.xlane.f32.xlu0 %v566
    %v597 = vpop.xlane.xlu0 %596
    %598 = vadd.xlane.f32.xlu0 %v567
    %v599 = vpop.xlane.xlu0 %598
    %v600 = vld [vmem:[#allocation2] sm:$0x1]
    %v602 = vlaneseq
    %v603 = vshrl.u32 %v602, 7
    %v604 = vsub.s32 0, %v603
    %v605 = vrot.slane %v600, %v604
    %v607 = vadd.f32 %v569, %v605
    %v608 = vadd.f32 %v571, %v605
    %v609 = vadd.f32 %v573, %v605
    %v610 = vadd.f32 %v575, %v605
    %v611 = vadd.f32 %v577, %v605
    %v612 = vadd.f32 %v579, %v605
    %v613 = vadd.f32 %v581, %v605
    %v614 = vadd.f32 %v583, %v605
    %v615 = vadd.f32 %v585, %v605
    %v616 = vadd.f32 %v587, %v605
    %v617 = vadd.f32 %v589, %v605
    %v618 = vadd.f32 %v591, %v605
    %v619 = vadd.f32 %v593, %v605
    %v620 = vadd.f32 %v595, %v605
    %v621 = vadd.f32 %v597, %v605
    %v622 = vadd.f32 %v599, %v605
    %v623 = vxor.u32 %v607, 2147483648
    %v624 = vxor.u32 %v608, 2147483648
    %v625 = vxor.u32 %v609, 2147483648
    %v626 = vxor.u32 %v610, 2147483648
    %v627 = vxor.u32 %v611, 2147483648
    %v628 = vxor.u32 %v612, 2147483648
    %v629 = vxor.u32 %v613, 2147483648
    %v630 = vxor.u32 %v614, 2147483648
    %v631 = vxor.u32 %v615, 2147483648
    %v632 = vxor.u32 %v616, 2147483648
    %v633 = vxor.u32 %v617, 2147483648
    %v634 = vxor.u32 %v618, 2147483648
    %v635 = vxor.u32 %v619, 2147483648
    %v636 = vxor.u32 %v620, 2147483648
    %v637 = vxor.u32 %v621, 2147483648
    %v638 = vxor.u32 %v622, 2147483648
    %v639 = vmul.f32 %v623, 1.442695
    %v640 = vpow.pop %v639
    %v641 = vmul.f32 %v624, 1.442695
    %v642 = vpow.pop %v641
    %v643 = vmul.f32 %v625, 1.442695
    %v644 = vpow.pop %v643
    %v645 = vmul.f32 %v626, 1.442695
    %v646 = vpow.pop %v645
    %v647 = vmul.f32 %v627, 1.442695
    %v648 = vpow.pop %v647
    %v649 = vmul.f32 %v628, 1.442695
    %v650 = vpow.pop %v649
    %v651 = vmul.f32 %v629, 1.442695
    %v652 = vpow.pop %v651
    %v653 = vmul.f32 %v630, 1.442695
    %v654 = vpow.pop %v653
    %v655 = vmul.f32 %v631, 1.442695
    %v656 = vpow.pop %v655
    %v657 = vmul.f32 %v632, 1.442695
    %v658 = vpow.pop %v657
    %v659 = vmul.f32 %v633, 1.442695
    %v660 = vpow.pop %v659
    %v661 = vmul.f32 %v634, 1.442695
    %v662 = vpow.pop %v661
    %v663 = vmul.f32 %v635, 1.442695
    %v664 = vpow.pop %v663
    %v665 = vmul.f32 %v636, 1.442695
    %v666 = vpow.pop %v665
    %v667 = vmul.f32 %v637, 1.442695
    %v668 = vpow.pop %v667
    %v669 = vmul.f32 %v638, 1.442695
    %v670 = vpow.pop %v669
    %v671 = vadd.f32 %v640, 1.0
    %v672 = vadd.f32 %v642, 1.0
    %v673 = vadd.f32 %v644, 1.0
    %v674 = vadd.f32 %v646, 1.0
    %v675 = vadd.f32 %v648, 1.0
    %v676 = vadd.f32 %v650, 1.0
    %v677 = vadd.f32 %v652, 1.0
    %v678 = vadd.f32 %v654, 1.0
    %v679 = vadd.f32 %v656, 1.0
    %v680 = vadd.f32 %v658, 1.0
    %v681 = vadd.f32 %v660, 1.0
    %v682 = vadd.f32 %v662, 1.0
    %v683 = vadd.f32 %v664, 1.0
    %v684 = vadd.f32 %v666, 1.0
    %v685 = vadd.f32 %v668, 1.0
    %v686 = vadd.f32 %v670, 1.0
    %v687 = vrcp.pop %v671
    %v688 = vmul.f32 1.0, %v687
    %v689 = vrcp.pop %v672
    %v690 = vmul.f32 1.0, %v689
    %v691 = vrcp.pop %v673
    %v692 = vmul.f32 1.0, %v691
    %v693 = vrcp.pop %v674
    %v694 = vmul.f32 1.0, %v693
    %v695 = vrcp.pop %v675
    %v696 = vmul.f32 1.0, %v695
    %v697 = vrcp.pop %v676
    %v698 = vmul.f32 1.0, %v697
    %v699 = vrcp.pop %v677
    %v700 = vmul.f32 1.0, %v699
    %v701 = vrcp.pop %v678
    %v702 = vmul.f32 1.0, %v701
    %v703 = vrcp.pop %v679
    %v704 = vmul.f32 1.0, %v703
    %v705 = vrcp.pop %v680
    %v706 = vmul.f32 1.0, %v705
    %v707 = vrcp.pop %v681
    %v708 = vmul.f32 1.0, %v707
    %v709 = vrcp.pop %v682
    %v710 = vmul.f32 1.0, %v709
    %v711 = vrcp.pop %v683
    %v712 = vmul.f32 1.0, %v711
    %v713 = vrcp.pop %v684
    %v714 = vmul.f32 1.0, %v713
    %v715 = vrcp.pop %v685
    %v716 = vmul.f32 1.0, %v715
    %v717 = vrcp.pop %v686
    %v718 = vmul.f32 1.0, %v717
    %vm719 = vcmask 7168
    %720 = vst.msk [vmem:[#allocation3] sm:$0xff] %vm719, %v688
    %721 = vst.msk [vmem:[#allocation3 + $0x8] sm:$0xff] %vm719, %v690
    %722 = vst.msk [vmem:[#allocation3 + $0x10] sm:$0xff] %vm719, %v692
    %723 = vst.msk [vmem:[#allocation3 + $0x18] sm:$0xff] %vm719, %v694
    %724 = vst.msk [vmem:[#allocation3 + $0x20] sm:$0xff] %vm719, %v696
    %725 = vst.msk [vmem:[#allocation3 + $0x28] sm:$0xff] %vm719, %v698
    %726 = vst.msk [vmem:[#allocation3 + $0x30] sm:$0xff] %vm719, %v700
    %727 = vst.msk [vmem:[#allocation3 + $0x38] sm:$0xff] %vm719, %v702
    %728 = vst.msk [vmem:[#allocation3 + $0x40] sm:$0xff] %vm719, %v704
    %729 = vst.msk [vmem:[#allocation3 + $0x48] sm:$0xff] %vm719, %v706
    %730 = vst.msk [vmem:[#allocation3 + $0x50] sm:$0xff] %vm719, %v708
    %731 = vst.msk [vmem:[#allocation3 + $0x58] sm:$0xff] %vm719, %v710
    %732 = vst.msk [vmem:[#allocation3 + $0x60] sm:$0xff] %vm719, %v712
    %733 = vst.msk [vmem:[#allocation3 + $0x68] sm:$0xff] %vm719, %v714
    %734 = vst.msk [vmem:[#allocation3 + $0x70] sm:$0xff] %vm719, %v716
    %735 = vst.msk [vmem:[#allocation3 + $0x78] sm:$0xff] %vm719, %v718
    // Predicated region
    $region30: #{mlp_forward.1} parent=1 // pred_check
      _
    $region31: #{mlp_forward.1} parent=1 // pred_check_branch
      %737 = sbr.rel (0) target = $region33
    $region32: #{mlp_forward.1} parent=1 // pred_region
      // Predicated region
      $region34: #{mlp_forward.1} parent=32 // pred_check
        _
      $region35: #{mlp_forward.1} parent=32 // pred_check_branch
        %739 = sbr.rel (0) target = $region37
      $region36: #{mlp_forward.1} parent=32 // pred_region
        // Predicated region
        $region38: #{mlp_forward.1} parent=36 // pred_check
          _
        $region39: #{mlp_forward.1} parent=36 // pred_check_branch
          %741 = sbr.rel (0) target = $region41
        $region40: #{mlp_forward.1} parent=36 // pred_region
          // Predicated region
          $region53: #{mlp_forward.1} parent=40 // pred_check
            _
          $region54: #{mlp_forward.1} parent=40 // pred_check_branch
            %756 = sbr.rel (0) target = $region56
          $region55: #{mlp_forward.1} parent=40 // pred_region
            loop: start=0, step=1, limit=1
            $region57: #{mlp_forward.1} parent=55 // loop_pre_header
              _
            $region58: #{mlp_forward.1} parent=55 // loop_header
              %s758 = sphi 0, %s762
              %p759 = scmp.ge.s32.totalorder %s758, 1
              %s763 = sphi [#allocation3], [#allocation3]
              %s764 = sphi %s7, %s7
            $region59: #{mlp_forward.1} parent=55 // loop_header_branch
              %761 = sbr.rel (%p759) target = $region63
            $region60: #{mlp_forward.1} parent=55 // loop_body
              %v765 = vld [vmem:[%s763] sm:$0xff]
              %766 = vst [vmem:[%s764] sm:$0xff] %v765
            $region61: #{mlp_forward.1} parent=55 // loop_footer
              %s762 = sadd.s32 1, %s758
            $region62: #{mlp_forward.1} parent=55 // loop_footer_branch
              %757 = sbr.rel target = $region58
            $region63: #{mlp_forward.1} parent=55 // loop_exit
              _
          $region56: #{mlp_forward.1} parent=40 // pred_fallthru
            _
          // Predicated region
          $region64: #{mlp_forward.1} parent=40 // pred_check
            _
          $region65: #{mlp_forward.1} parent=40 // pred_check_branch
            %768 = sbr.rel target = $region67
          $region66: #{mlp_forward.1} parent=40 // pred_region
            _
          $region67: #{mlp_forward.1} parent=40 // pred_fallthru
            _
        $region41: #{mlp_forward.1} parent=36 // pred_fallthru
          _
        // Predicated region
        $region42: #{mlp_forward.1} parent=36 // pred_check
          _
        $region43: #{mlp_forward.1} parent=36 // pred_check_branch
          %743 = sbr.rel target = $region45
        $region44: #{mlp_forward.1} parent=36 // pred_region
          loop: start=0, step=1, limit=1
          $region46: #{mlp_forward.1} parent=44 // loop_pre_header
            _
          $region47: #{mlp_forward.1} parent=44 // loop_header
            %s746 = sphi 0, %s750
            %p747 = scmp.ge.s32.totalorder %s746, 1
            %s751 = sphi [#allocation3], [#allocation3]
            %s752 = sphi %s7, %s7
          $region48: #{mlp_forward.1} parent=44 // loop_header_branch
            %749 = sbr.rel (%p747) target = $region52
          $region49: #{mlp_forward.1} parent=44 // loop_body
            %v753 = vld [vmem:[%s751] sm:$0xff]
            %754 = vst [vmem:[%s752] sm:$0xff] %v753
          $region50: #{mlp_forward.1} parent=44 // loop_footer
            %s750 = sadd.s32 1, %s746
          $region51: #{mlp_forward.1} parent=44 // loop_footer_branch
            %745 = sbr.rel target = $region47
          $region52: #{mlp_forward.1} parent=44 // loop_exit
            _
        $region45: #{mlp_forward.1} parent=36 // pred_fallthru
          _
      $region37: #{mlp_forward.1} parent=32 // pred_fallthru
        _
      %769 = vnop
    $region33: #{mlp_forward.1} parent=1 // pred_fallthru
      _
    // Predicated region
    $region68: #{mlp_forward.1} parent=1 // pred_check
      _
    $region69: #{mlp_forward.1} parent=1 // pred_check_branch
      %771 = sbr.rel (0) target = $region71
    $region70: #{mlp_forward.1} parent=1 // pred_region
      _
    $region71: #{mlp_forward.1} parent=1 // pred_fallthru
      _

</llo_original>
